<compile_context>
chip_gen: v7x
topology: tpu7x:2x2x1
jax: 0.10.0
libtpu: 0.0.40
codegen_flags: <defaults>
</compile_context>

<pallas_src>
import functools
import math

import jax
import jax.numpy as jnp
import numpy as np
from jax import lax
from jax.experimental import pallas as pl
from jax.experimental.pallas import tpu as pltpu


def _round_up(n, m):
    return ((n + m - 1) // m) * m


# ---------------------------------------------------------------------------
# Pallas kernel: MaskedConv1D(K, stride=1, padding=K//2) + mask + LayerNorm(C)
# ---------------------------------------------------------------------------
def _conv_ln_kernel(x_ref, xh_ref, w_ref, b_ref, g_ref, beta_ref, m_ref,
                    out_ref, *, k_taps, c_out, l_tile, eps):
    # x_ref   : (1, c_in_p, l_tile)   bf16 main time tile (pre-masked, padded)
    # xh_ref  : (1, c_in_p, 128)      bf16 halo tile (next 128 columns)
    # w_ref   : (K, c_out_p, c_in_p)  bf16 conv weights, one tap per slice
    # b_ref   : (c_out_p, 1) f32      conv bias
    # g_ref   : (c_out_p, 1) f32      LayerNorm gamma
    # beta_ref: (c_out_p, 1) f32      LayerNorm beta
    # m_ref   : (1, 1, l_tile) f32    "valid" output mask for this tile
    # out_ref : (1, c_out_p, l_tile) f32
    win = jnp.concatenate([x_ref[0], xh_ref[0]], axis=-1)   # (c_in_p, l_tile+128)

    # K small MXU dots accumulated in f32 (no im2col slab round-trip).
    acc = jnp.dot(w_ref[0], win[:, :l_tile], preferred_element_type=jnp.float32)
    for k in range(1, k_taps):                               # K is small & static
        acc = acc + jnp.dot(w_ref[k], win[:, k:k + l_tile],
                            preferred_element_type=jnp.float32)

    conv = (acc + b_ref[...]) * m_ref[0]                     # bias + output mask

    # LayerNorm over channels in one pass: padded channel rows are exactly zero
    # (padded weight/bias rows are zero), so they contribute nothing to either
    # sum and dividing by the real channel count is exact.
    inv_c = 1.0 / c_out
    mu = jnp.sum(conv, axis=0, keepdims=True) * inv_c                # (1, l_tile)
    ex2 = jnp.sum(conv * conv, axis=0, keepdims=True) * inv_c
    inv_sigma = lax.rsqrt(ex2 - mu * mu + eps)                       # EUP rsqrt
    out_ref[0] = ((conv - mu) * (inv_sigma * g_ref[...])
                  + beta_ref[...]).astype(out_ref.dtype)


def masked_conv1d_layernorm(x, mask, weight, bias, gamma, beta, *,
                            eps=1e-5, l_tile=1024):
    """Fused [pre-mask] -> MaskedConv1D(k, s=1, p=k//2) -> *valid -> LayerNorm.

    x      : (B, C_in, T) float
    mask   : (B, T) bool, True = padded/invalid (module convention)
    weight : (C_out, C_in, K)  PyTorch Conv1d layout, K odd
    bias, gamma, beta : (C_out,)
    returns (B, C_out, T) float32

    The valid pre-mask is fused into the input padding; in the FPN this is a
    no-op for resized levels (already zero beyond the valid prefix) and
    reproduces the module's top-level `(~mask) * x` for level 0.
    """
    B, C_in, T = x.shape
    C_out, _, K = weight.shape
    assert K % 2 == 1 and K <= 128, "MaskedConv1D requires odd (small) kernel"
    pad = K // 2
    f32, bf16 = jnp.float32, jnp.bfloat16

    c_in_p = _round_up(C_in, 16)          # bf16 sublane packing
    c_out_p = _round_up(C_out, 16)
    l_tile = max(128, (int(l_tile) // 128) * 128)
    l_tile = min(l_tile, _round_up(T, 128))
    t_p = _round_up(T, l_tile)            # lane-dense output length
    n_tiles = t_p // l_tile
    t_in = t_p + 128                      # room for the lane-aligned halo tile

    valid_f = jnp.logical_not(mask).astype(f32)              # (B, T), 1 = valid

    # Fused pre-mask + zero-pad + bf16 cast (single x_pad construction).
    x_m = (x.astype(f32) * valid_f[:, None, :]).astype(bf16)
    x_pad = jnp.zeros((B, c_in_p, t_in), bf16)
    x_pad = x_pad.at[:, :C_in, pad:pad + T].set(x_m)

    mask_f = jnp.zeros((B, 1, t_p), f32).at[:, 0, :T].set(valid_f)

    # (K, c_out_p, c_in_p) bf16: w3d[k, o, c] = weight[o, c, k].
    w3d = jnp.zeros((K, c_out_p, c_in_p), bf16)
    w3d = w3d.at[:, :C_out, :C_in].set(
        jnp.transpose(weight, (2, 0, 1)).astype(bf16))

    def col(v):
        return jnp.zeros((c_out_p, 1), f32).at[:C_out, 0].set(v.astype(f32))

    b_p, g_p, be_p = col(bias), col(gamma), col(beta)

    kernel = functools.partial(_conv_ln_kernel, k_taps=K, c_out=C_out,
                               l_tile=l_tile, eps=float(eps))

    halo_blocks = l_tile // 128
    cost = pl.CostEstimate(
        flops=2 * B * t_p * C_out * K * C_in,
        transcendentals=B * t_p,
        bytes_accessed=(x_pad.size * 2 + w3d.size * 2 + mask_f.size * 4
                        + B * c_out_p * t_p * 4))

    out = pl.pallas_call(
        kernel,
        out_shape=jax.ShapeDtypeStruct((B, c_out_p, t_p), f32),
        grid_spec=pltpu.PrefetchScalarGridSpec(
            num_scalar_prefetch=0,
            grid=(n_tiles, B),    # time tiles first (megacore split if B == 1)
            in_specs=[
                # main time tile of x
                pl.BlockSpec((1, c_in_p, l_tile), lambda j, b: (b, 0, j)),
                # 128-lane halo tile: the next 128 columns of the same array
                pl.BlockSpec((1, c_in_p, 128),
                             lambda j, b: (b, 0, (j + 1) * halo_blocks)),
                pl.BlockSpec((K, c_out_p, c_in_p), lambda j, b: (0, 0, 0)),
                pl.BlockSpec((c_out_p, 1), lambda j, b: (0, 0)),
                pl.BlockSpec((c_out_p, 1), lambda j, b: (0, 0)),
                pl.BlockSpec((c_out_p, 1), lambda j, b: (0, 0)),
                pl.BlockSpec((1, 1, l_tile), lambda j, b: (b, 0, j)),
            ],
            out_specs=pl.BlockSpec((1, c_out_p, l_tile), lambda j, b: (b, 0, j)),
        ),
        compiler_params=pltpu.CompilerParams(
            dimension_semantics=("parallel", "parallel")),
        cost_estimate=cost,
    )(x_pad, x_pad, w3d, b_p, g_p, be_p, mask_f)

    return out[:, :C_out, :T]


# ---------------------------------------------------------------------------
# MaskedResizer (batched, device-side, jittable) and the FPN forward
# ---------------------------------------------------------------------------
def _linear_interp_1d(x, out_size):
    """F.interpolate(mode='linear', align_corners=False) along the last axis."""
    l_in = x.shape[-1]
    if out_size == l_in:
        return x
    scale = l_in / out_size
    dst = jnp.arange(out_size, dtype=jnp.float32)
    src = jnp.clip((dst + 0.5) * scale - 0.5, 0.0, float(l_in - 1))
    lo = jnp.floor(src).astype(jnp.int32)
    hi = jnp.minimum(lo + 1, l_in - 1)
    w = src - lo.astype(jnp.float32)
    return x[..., lo] * (1.0 - w) + x[..., hi] * w


def masked_resizer(x, mask):
    """MaskedResizer.forward: per-sample linear resize of the valid prefix.

    Fully batched on device (no host sync, no per-sample Python loop).
    # TODO(synk): output extents are data-dependent (valid lengths), so this
    # stays as XLA gather glue between the Pallas conv levels, not a kernel.
    """
    B, C, T = x.shape
    t_out = T // 2  # floor(T * 0.5)
    mask_out_f = _linear_interp_1d(
        mask.astype(jnp.float32)[:, None, :], t_out)[:, 0, :]
    mask_out = mask_out_f > 0.5

    valid_in_i = jnp.sum(jnp.logical_not(mask), axis=1).astype(jnp.int32)
    valid_out_i = jnp.sum(jnp.logical_not(mask_out), axis=1).astype(jnp.int32)
    valid_in = valid_in_i.astype(jnp.float32)                      # (B,)
    valid_out = valid_out_i.astype(jnp.float32)

    dst = jnp.arange(t_out, dtype=jnp.float32)[None, :]            # (1, t_out)
    scale = valid_in / jnp.maximum(valid_out, 1.0)                 # (B,)
    src = (dst + 0.5) * scale[:, None] - 0.5
    src = jnp.clip(src, 0.0, jnp.maximum(valid_in[:, None] - 1.0, 0.0))
    lo = jnp.floor(src).astype(jnp.int32)                          # (B, t_out)
    hi = jnp.minimum(lo + 1, jnp.maximum(valid_in_i[:, None] - 1, 0))
    w = src - lo.astype(jnp.float32)

    lo_b = jnp.broadcast_to(lo[:, None, :], (B, C, t_out))
    hi_b = jnp.broadcast_to(hi[:, None, :], (B, C, t_out))
    x_lo = jnp.take_along_axis(x, lo_b, axis=2)
    x_hi = jnp.take_along_axis(x, hi_b, axis=2)
    resized = x_lo * (1.0 - w[:, None, :]) + x_hi * w[:, None, :]

    keep = dst < valid_out[:, None]                                # (B, t_out)
    out = jnp.where(keep[:, None, :], resized, 0.0).astype(x.dtype)
    return out, mask_out


def multi_scale_fpn_forward(x, mask, params, *, num_feature_levels,
                            eps=1e-5, conv_ln_fn=masked_conv1d_layernorm):
    """MultiScaleFPN.forward.

    The reference module's forward iterates `self.embedders`; its constructor
    builds per-level Sequential(MaskedConv1D(feature_dim, hidden_dim, k=3,
    s=1, p=1), LayerNorm(hidden_dim)) blocks, so params[i] holds one
    (conv_weight, conv_bias, ln_gamma, ln_beta) per feature level.

    The module's top-level `(~mask) * x` pre-mask is folded into conv_ln_fn's
    input construction; the resizer only reads the valid prefix, so results
    are unchanged for the valid-prefix padding masks the module assumes.
    """
    feats, masks = [x], [mask]
    cur_f, cur_m = x, mask
    for _ in range(1, num_feature_levels):
        cur_f, cur_m = masked_resizer(cur_f, cur_m)
        feats.append(cur_f)
        masks.append(cur_m)
    out_feats, out_masks = [], []
    for i in range(num_feature_levels):
        w, b, g, be = params[i]
        out_feats.append(conv_ln_fn(feats[i], masks[i], w, b, g, be, eps=eps))
        out_masks.append(masks[i])   # MaskedConv1D(stride=1) returns mask as-is
    return out_feats, out_masks


# ---------------------------------------------------------------------------
# Pure-JAX reference for the fused conv + LayerNorm (verification only).
# Mirrors the kernel's bf16 data path (x / weights bf16, f32 accumulation).
# ---------------------------------------------------------------------------
def _ref_conv_ln(x, mask, weight, bias, gamma, beta, *, eps=1e-5):
    C_out, _, K = weight.shape
    valid = jnp.logical_not(mask).astype(jnp.float32)
    x32 = (x.astype(jnp.float32) * valid[:, None, :]
           ).astype(jnp.bfloat16).astype(jnp.float32)
    w32 = weight.astype(jnp.bfloat16).astype(jnp.float32)
    out = lax.conv_general_dilated(
        x32, w32, window_strides=(1,), padding=[(K // 2, K // 2)],
        dimension_numbers=("NCH", "OIH", "NCH"),
        precision=lax.Precision.HIGHEST)
    out = out + bias.reshape(1, C_out, 1).astype(jnp.float32)
    out = out * valid[:, None, :]
    mu = jnp.mean(out, axis=1, keepdims=True)
    res = out - mu
    sigma = jnp.mean(res * res, axis=1, keepdims=True)
    out = res / jnp.sqrt(sigma + eps)
    return out * gamma.reshape(1, C_out, 1) + beta.reshape(1, C_out, 1)


if __name__ == "__main__":
    B, FEATURE_DIM, HIDDEN_DIM, T = 2, 4, 32, 16
    NUM_LEVELS, K, EPS = 2, 3, 1e-5

    key = jax.random.PRNGKey(0)
    keys = jax.random.split(key, 1 + NUM_LEVELS)
    x = jax.random.normal(keys[0], (B, FEATURE_DIM, T), dtype=jnp.float32)

    # Valid-prefix padding masks (True = padded), module convention.
    lengths = jnp.array([16, 11], dtype=jnp.int32)
    mask = jnp.arange(T)[None, :] >= lengths[:, None]          # (B, T) bool

    # Per-level embedder params: xavier-uniform conv weight, zero bias
    # (module __init_weights__), LayerNorm gamma=1 / beta=0.
    bound = math.sqrt(6.0 / (FEATURE_DIM * K + HIDDEN_DIM * K))
    params = []
    for lvl in range(NUM_LEVELS):
        w = jax.random.uniform(keys[1 + lvl], (HIDDEN_DIM, FEATURE_DIM, K),
                               dtype=jnp.float32, minval=-bound, maxval=bound)
        params.append((w,
                       jnp.zeros((HIDDEN_DIM,), jnp.float32),
                       jnp.ones((HIDDEN_DIM,), jnp.float32),
                       jnp.zeros((HIDDEN_DIM,), jnp.float32)))

    fwd_pallas = jax.jit(functools.partial(
        multi_scale_fpn_forward, num_feature_levels=NUM_LEVELS, eps=EPS))
    out_feats, out_masks = fwd_pallas(x, mask, params)
    for f in out_feats:
        jax.block_until_ready(f)

    # Verify the Pallas conv+LN path against the pure-JAX reference.
    fwd_ref = jax.jit(functools.partial(
        multi_scale_fpn_forward, num_feature_levels=NUM_LEVELS, eps=EPS,
        conv_ln_fn=_ref_conv_ln))
    ref_feats, ref_masks = fwd_ref(x, mask, params)
    for got, ref in zip(out_feats, ref_feats):
        np.testing.assert_allclose(np.asarray(got), np.asarray(ref),
                                   rtol=2e-3, atol=2e-3)
    for got, ref in zip(out_masks, ref_masks):
        np.testing.assert_array_equal(np.asarray(got), np.asarray(ref))

    print("KERNEL_OK")
</pallas_src>

<mosaic_0001>
module attributes {stable_mosaic.version = 11 : i64} {
  func.func @_conv_ln_kernel(%arg0: i32, %arg1: i32, %arg2: memref<1x16x128xbf16, #tpu.memory_space<vmem>>, %arg3: memref<1x16x128xbf16, #tpu.memory_space<vmem>>, %arg4: memref<3x32x16xbf16, #tpu.memory_space<vmem>>, %arg5: memref<32x1xf32, #tpu.memory_space<vmem>>, %arg6: memref<32x1xf32, #tpu.memory_space<vmem>>, %arg7: memref<32x1xf32, #tpu.memory_space<vmem>>, %arg8: memref<1x1x128xf32, #tpu.memory_space<vmem>>, %arg9: memref<1x32x128xf32, #tpu.memory_space<vmem>>) attributes {dimension_semantics = [#tpu.dimension_semantics<parallel>, #tpu.dimension_semantics<parallel>], iteration_bounds = array<i64: 1, 2>, scalar_prefetch = 0 : i64, scratch_operands = 0 : i64, tpu.core_type = #tpu.core_type<tc>, window_params = [{transform_indices = @transform_0, window_bounds = array<i64: 1, 16, 128>}, {transform_indices = @transform_1, window_bounds = array<i64: 1, 16, 128>}, {pipeline_mode = #tpu.pipeline_mode<synchronous>, transform_indices = @transform_2, window_bounds = array<i64: 3, 32, 16>}, {pipeline_mode = #tpu.pipeline_mode<synchronous>, transform_indices = @transform_3, window_bounds = array<i64: 32, 1>}, {pipeline_mode = #tpu.pipeline_mode<synchronous>, transform_indices = @transform_4, window_bounds = array<i64: 32, 1>}, {pipeline_mode = #tpu.pipeline_mode<synchronous>, transform_indices = @transform_5, window_bounds = array<i64: 32, 1>}, {transform_indices = @transform_6, window_bounds = array<i64: 1, 1, 128>}, {transform_indices = @transform_7, window_bounds = array<i64: 1, 32, 128>}]} {
    %c0 = arith.constant 0 : index
    %c0_0 = arith.constant 0 : index
    %c0_1 = arith.constant 0 : index
    %0 = vector.load %arg2[%c0, %c0_0, %c0_1] : memref<1x16x128xbf16, #tpu.memory_space<vmem>>, vector<1x16x128xbf16>
    %1 = vector.shape_cast %0 : vector<1x16x128xbf16> to vector<16x128xbf16>
    %c0_2 = arith.constant 0 : index
    %c0_3 = arith.constant 0 : index
    %c0_4 = arith.constant 0 : index
    %2 = vector.load %arg3[%c0_2, %c0_3, %c0_4] : memref<1x16x128xbf16, #tpu.memory_space<vmem>>, vector<1x16x128xbf16>
    %3 = vector.shape_cast %2 : vector<1x16x128xbf16> to vector<16x128xbf16>
    %4 = tpu.concatenate %1, %3 in 1 : vector<16x128xbf16>, vector<16x128xbf16> -> vector<16x256xbf16>
    %c0_5 = arith.constant 0 : index
    %c0_6 = arith.constant 0 : index
    %c0_7 = arith.constant 0 : index
    %5 = vector.load %arg4[%c0_5, %c0_6, %c0_7] : memref<3x32x16xbf16, #tpu.memory_space<vmem>>, vector<1x32x16xbf16>
    %6 = vector.shape_cast %5 : vector<1x32x16xbf16> to vector<32x16xbf16>
    %7 = vector.extract_strided_slice %4 {offsets = [0, 0], sizes = [16, 128], strides = [1, 1]} : vector<16x256xbf16> to vector<16x128xbf16>
    %cst = arith.constant dense<0.000000e+00> : vector<32x128xf32>
    %8 = tpu.matmul %6, %7, %cst {dimension_numbers = #tpu.dot_dimension_numbers<[1], [0], [0], [1], [0, 0, 1, 1], [], []>} : vector<32x16xbf16>, vector<16x128xbf16>, vector<32x128xf32> -> vector<32x128xf32>
    %c1 = arith.constant 1 : index
    %c0_8 = arith.constant 0 : index
    %c0_9 = arith.constant 0 : index
    %9 = vector.load %arg4[%c1, %c0_8, %c0_9] : memref<3x32x16xbf16, #tpu.memory_space<vmem>>, vector<1x32x16xbf16>
    %10 = vector.shape_cast %9 : vector<1x32x16xbf16> to vector<32x16xbf16>
    %11 = vector.extract_strided_slice %4 {offsets = [0, 1], sizes = [16, 128], strides = [1, 1]} : vector<16x256xbf16> to vector<16x128xbf16>
    %cst_10 = arith.constant dense<0.000000e+00> : vector<32x128xf32>
    %12 = tpu.matmul %10, %11, %cst_10 {dimension_numbers = #tpu.dot_dimension_numbers<[1], [0], [0], [1], [0, 0, 1, 1], [], []>} : vector<32x16xbf16>, vector<16x128xbf16>, vector<32x128xf32> -> vector<32x128xf32>
    %13 = arith.addf %8, %12 : vector<32x128xf32>
    %c2 = arith.constant 2 : index
    %c0_11 = arith.constant 0 : index
    %c0_12 = arith.constant 0 : index
    %14 = vector.load %arg4[%c2, %c0_11, %c0_12] : memref<3x32x16xbf16, #tpu.memory_space<vmem>>, vector<1x32x16xbf16>
    %15 = vector.shape_cast %14 : vector<1x32x16xbf16> to vector<32x16xbf16>
    %16 = vector.extract_strided_slice %4 {offsets = [0, 2], sizes = [16, 128], strides = [1, 1]} : vector<16x256xbf16> to vector<16x128xbf16>
    %cst_13 = arith.constant dense<0.000000e+00> : vector<32x128xf32>
    %17 = tpu.matmul %15, %16, %cst_13 {dimension_numbers = #tpu.dot_dimension_numbers<[1], [0], [0], [1], [0, 0, 1, 1], [], []>} : vector<32x16xbf16>, vector<16x128xbf16>, vector<32x128xf32> -> vector<32x128xf32>
    %18 = arith.addf %13, %17 : vector<32x128xf32>
    %c0_14 = arith.constant 0 : index
    %c0_15 = arith.constant 0 : index
    %19 = vector.load %arg5[%c0_14, %c0_15] : memref<32x1xf32, #tpu.memory_space<vmem>>, vector<32x1xf32>
    %20 = vector.broadcast %19 : vector<32x1xf32> to vector<32x128xf32>
    %21 = arith.addf %18, %20 : vector<32x128xf32>
    %c0_16 = arith.constant 0 : index
    %c0_17 = arith.constant 0 : index
    %c0_18 = arith.constant 0 : index
    %22 = vector.load %arg8[%c0_16, %c0_17, %c0_18] : memref<1x1x128xf32, #tpu.memory_space<vmem>>, vector<1x1x128xf32>
    %23 = vector.shape_cast %22 : vector<1x1x128xf32> to vector<1x128xf32>
    %24 = vector.broadcast %23 : vector<1x128xf32> to vector<32x128xf32>
    %25 = arith.mulf %21, %24 : vector<32x128xf32>
    %cst_19 = arith.constant dense<0.000000e+00> : vector<128xf32>
    %26 = vector.multi_reduction <add>, %25, %cst_19 [0] : vector<32x128xf32> to vector<128xf32>
    %27 = vector.shape_cast %26 : vector<128xf32> to vector<1x128xf32>
    %cst_20 = arith.constant 3.125000e-02 : f32
    %28 = vector.broadcast %cst_20 : f32 to vector<1x128xf32>
    %29 = arith.mulf %27, %28 : vector<1x128xf32>
    %30 = arith.mulf %25, %25 : vector<32x128xf32>
    %cst_21 = arith.constant dense<0.000000e+00> : vector<128xf32>
    %31 = vector.multi_reduction <add>, %30, %cst_21 [0] : vector<32x128xf32> to vector<128xf32>
    %32 = vector.shape_cast %31 : vector<128xf32> to vector<1x128xf32>
    %cst_22 = arith.constant 3.125000e-02 : f32
    %33 = vector.broadcast %cst_22 : f32 to vector<1x128xf32>
    %34 = arith.mulf %32, %33 : vector<1x128xf32>
    %35 = arith.mulf %29, %29 : vector<1x128xf32>
    %36 = arith.subf %34, %35 : vector<1x128xf32>
    %cst_23 = arith.constant 9.99999974E-6 : f32
    %37 = vector.broadcast %cst_23 : f32 to vector<1x128xf32>
    %38 = arith.addf %36, %37 : vector<1x128xf32>
    %39 = math.rsqrt %38 : vector<1x128xf32>
    %40 = vector.broadcast %29 : vector<1x128xf32> to vector<32x128xf32>
    %41 = arith.subf %25, %40 : vector<32x128xf32>
    %c0_24 = arith.constant 0 : index
    %c0_25 = arith.constant 0 : index
    %42 = vector.load %arg6[%c0_24, %c0_25] : memref<32x1xf32, #tpu.memory_space<vmem>>, vector<32x1xf32>
    %43 = vector.broadcast %39 : vector<1x128xf32> to vector<32x128xf32>
    %44 = vector.broadcast %42 : vector<32x1xf32> to vector<32x128xf32>
    %45 = arith.mulf %43, %44 : vector<32x128xf32>
    %46 = arith.mulf %41, %45 : vector<32x128xf32>
    %c0_26 = arith.constant 0 : index
    %c0_27 = arith.constant 0 : index
    %47 = vector.load %arg7[%c0_26, %c0_27] : memref<32x1xf32, #tpu.memory_space<vmem>>, vector<32x1xf32>
    %48 = vector.broadcast %47 : vector<32x1xf32> to vector<32x128xf32>
    %49 = arith.addf %46, %48 : vector<32x128xf32>
    %c0_28 = arith.constant 0 : index
    %c0_29 = arith.constant 0 : index
    %c0_30 = arith.constant 0 : index
    %50 = vector.load %arg9[%c0_28, %c0_29, %c0_30] : memref<1x32x128xf32, #tpu.memory_space<vmem>>, vector<1x32x128xf32>
    %51 = vector.shape_cast %50 : vector<1x32x128xf32> to vector<32x128xf32>
    %52 = vector.shape_cast %49 : vector<32x128xf32> to vector<1x32x128xf32>
    tpu.vector_store %arg9[%c0_28, %c0_29, %c0_30], %52 {strides = array<i32>} : memref<1x32x128xf32, #tpu.memory_space<vmem>>, vector<1x32x128xf32>,
    return
  }
  func.func @transform_0(%arg0: i32, %arg1: i32) -> (i32, i32, i32) {
    %c0_i32 = arith.constant 0 : i32
    %c0_i32_0 = arith.constant 0 : i32
    return %arg1, %c0_i32, %arg0 : i32, i32, i32
  }
  func.func @transform_1(%arg0: i32, %arg1: i32) -> (i32, i32, i32) {
    %c1_i32 = arith.constant 1 : i32
    %0 = arith.addi %arg0, %c1_i32 : i32
    %c1_i32_0 = arith.constant 1 : i32
    %1 = arith.muli %0, %c1_i32_0 : i32
    %c0_i32 = arith.constant 0 : i32
    %c0_i32_1 = arith.constant 0 : i32
    return %arg1, %c0_i32, %1 : i32, i32, i32
  }
  func.func @transform_2(%arg0: i32, %arg1: i32) -> (i32, i32, i32) {
    %c0_i32 = arith.constant 0 : i32
    %c0_i32_0 = arith.constant 0 : i32
    %c0_i32_1 = arith.constant 0 : i32
    %c0_i32_2 = arith.constant 0 : i32
    return %c0_i32, %c0_i32_0, %c0_i32_1 : i32, i32, i32
  }
  func.func @transform_3(%arg0: i32, %arg1: i32) -> (i32, i32) {
    %c0_i32 = arith.constant 0 : i32
    %c0_i32_0 = arith.constant 0 : i32
    %c0_i32_1 = arith.constant 0 : i32
    return %c0_i32, %c0_i32_0 : i32, i32
  }
  func.func @transform_4(%arg0: i32, %arg1: i32) -> (i32, i32) {
    %c0_i32 = arith.constant 0 : i32
    %c0_i32_0 = arith.constant 0 : i32
    %c0_i32_1 = arith.constant 0 : i32
    return %c0_i32, %c0_i32_0 : i32, i32
  }
  func.func @transform_5(%arg0: i32, %arg1: i32) -> (i32, i32) {
    %c0_i32 = arith.constant 0 : i32
    %c0_i32_0 = arith.constant 0 : i32
    %c0_i32_1 = arith.constant 0 : i32
    return %c0_i32, %c0_i32_0 : i32, i32
  }
  func.func @transform_6(%arg0: i32, %arg1: i32) -> (i32, i32, i32) {
    %c0_i32 = arith.constant 0 : i32
    %c0_i32_0 = arith.constant 0 : i32
    return %arg1, %c0_i32, %arg0 : i32, i32, i32
  }
  func.func @transform_7(%arg0: i32, %arg1: i32) -> (i32, i32, i32) {
    %c0_i32 = arith.constant 0 : i32
    %c0_i32_0 = arith.constant 0 : i32
    return %arg1, %c0_i32, %arg0 : i32, i32, i32
  }
}

</mosaic_0001>

<llo_original>
// kernel: multi_scale_fpn_forward.3
$region0: #{multi_scale_fpn_forward.3}
  #allocation0 [shape = 'u32[]', space=smem, size = 0x4, offset = 0x4, fixed_abs, tag = 'smem constant byte address 0x4 - core index']
  #allocation1 [shape = 'u32[144,128]{1,0:T(1,128)}', space=vmem, size = 0x12000, scoped, tag = 'internal scratch']
  %s0 = inlined_call_operand.vmem [shape: bf16[2,16,256], index: 0, kind: input, shape index: {}, may-alias: {0,1}]
  %s1 = inlined_call_operand.vmem [shape: bf16[2,16,256], index: 1, kind: input, shape index: {}, may-alias: {0,1}]
  %s2 = inlined_call_operand.vmem [shape: bf16[3,32,16], index: 2, kind: input, shape index: {}]
  %s3 = inlined_call_operand.vmem [shape: f32[32,1], index: 3, kind: input, shape index: {}]
  %s4 = inlined_call_operand.vmem [shape: f32[32,1], index: 4, kind: input, shape index: {}]
  %s5 = inlined_call_operand.vmem [shape: f32[32,1], index: 5, kind: input, shape index: {}]
  %s6 = inlined_call_operand.vmem [shape: f32[2,1,128], index: 6, kind: input, shape index: {}]
  %s7 = inlined_call_operand.vmem [shape: f32[2,32,128], index: 7, kind: output, shape index: {}]
  %s8 = sld [smem:[#allocation0]]
  $region143: #{multi_scale_fpn_forward.3} parent=0
    _
  %s10 = ssub.s32 1, %s8
  %s11 = scalar_select 0, %s10, %s8
  $region1: #{multi_scale_fpn_forward.3} parent=0
    #allocation2 [shape = 'u8[8192]{0}', space=vmem, size = 0x2000, scoped, tag = 'input window, operand 0']
    #allocation3 [shape = 'u8[8192]{0}', space=vmem, size = 0x2000, scoped, tag = 'input window, operand 1']
    loop: start=0, step=1, limit=4
    $region2: #{multi_scale_fpn_forward.3} parent=1 // loop_pre_header
      _
    $region3: #{multi_scale_fpn_forward.3} parent=1 // loop_header
      %s13 = sphi 0, %s17
      %p14 = scmp.ge.s32.totalorder %s13, 4
      %s20 = sphi 0, %s32
      %s21 = sphi 0, %s28
      %s22 = sphi 0, %s20
      %s23 = sphi 0, %s21
      %s24 = sphi 0, %s22
      %s25 = sphi 0, %s23
      %s37 = sphi 0, %s39
      %s40 = sphi 0, %s37
      %s41 = sphi 0, %s40
      %s57 = sphi 0, %s41
      %s67 = sphi 0, %s69
      %s70 = sphi 0, %s67
      %s71 = sphi 0, %s70
      %s87 = sphi 0, %s71
      %s91 = sphi 0, %s91
      %s93 = sphi 0, %s91
      %s94 = sphi 0, %s93
      %s108 = sphi 0, %s94
      %s112 = sphi 0, %s112
      %s114 = sphi 0, %s112
      %s115 = sphi 0, %s114
      %s129 = sphi 0, %s115
      %s133 = sphi 0, %s133
      %s135 = sphi 0, %s133
      %s136 = sphi 0, %s135
      %s150 = sphi 0, %s136
      %s154 = sphi 0, %s154
      %s156 = sphi 0, %s154
      %s157 = sphi 0, %s156
      %s171 = sphi 0, %s157
      %s179 = sphi 0, %s181
      %s182 = sphi 0, %s179
      %s183 = sphi 0, %s182
      %s199 = sphi 0, %s183
      %s207 = sphi 0, %s209
      %s210 = sphi 0, %s207
      %s211 = sphi 0, %s210
      %s227 = sphi 0, %s211
    $region4: #{multi_scale_fpn_forward.3} parent=1 // loop_header_branch
      %16 = sbr.rel (%p14) target = $region8
    $region5: #{multi_scale_fpn_forward.3} parent=1 // loop_body
      %s18 = ssub.s32 %s13, 1
      %s19 = ssub.s32 %s13, 2
      %s26 = sadd.s32 1, %s21
      %p27 = scmp.ge.s32.totalorder %s26, 2
      %s28 = scalar_select %p27, 0, %s26
      %s29 = sadd.s32 1, %s20
      %s30 = scalar_select %p27, %s29, %s20
      %p31 = scmp.ge.s32.totalorder %s30, 1
      %s32 = scalar_select %p31, 0, %s30
      %s33 = ssub.s32 %s21, %s28
      %s34 = ssub.s32 %s20, %s32
      %s35 = sor.u32 %s33, %s34
      %p36 = scmp.eq.s32.totalorder %s35, 0
      %s38 = sadd.s32 %s37, 1
      %s39 = scalar_select %p36, %s37, %s38
      %p42 = pneg %p36
      %p43 = scmp.eq.s32.totalorder %s13, 1
      %p44 = por %p42, %p43
      %p45 = scmp.ne.s32.totalorder %s37, %s40
      %p46 = scmp.eq.s32.totalorder %s13, 0
      %p47 = por %p45, %p46
      %p48 = scmp.ne.s32.totalorder %s37, %s40
      %p49 = scmp.eq.s32.totalorder %s18, 1
      %p50 = por %p48, %p49
      %p51 = scmp.ne.s32.totalorder %s40, %s41
      %p52 = scmp.eq.s32.totalorder %s18, 0
      %p53 = por %p51, %p52
      %p54 = scmp.ne.s32.totalorder %s40, %s41
      %p55 = scmp.eq.s32.totalorder %s19, 1
      %p56 = por %p54, %p55
      %p58 = scmp.ne.s32.totalorder %s41, %s57
      %p59 = scmp.eq.s32.totalorder %s19, 0
      %p60 = por %p58, %p59
      %s61 = sadd.s32 %s20, 1
      %s62 = sadd.s32 %s32, 1
      %s63 = ssub.s32 %s21, %s28
      %s64 = ssub.s32 %s61, %s62
      %s65 = sor.u32 %s63, %s64
      %p66 = scmp.eq.s32.totalorder %s65, 0
      %s68 = sadd.s32 %s67, 1
      %s69 = scalar_select %p66, %s67, %s68
      %p72 = pneg %p66
      %p73 = scmp.eq.s32.totalorder %s13, 1
      %p74 = por %p72, %p73
      %p75 = scmp.ne.s32.totalorder %s67, %s70
      %p76 = scmp.eq.s32.totalorder %s13, 0
      %p77 = por %p75, %p76
      %p78 = scmp.ne.s32.totalorder %s67, %s70
      %p79 = scmp.eq.s32.totalorder %s18, 1
      %p80 = por %p78, %p79
      %p81 = scmp.ne.s32.totalorder %s70, %s71
      %p82 = scmp.eq.s32.totalorder %s18, 0
      %p83 = por %p81, %p82
      %p84 = scmp.ne.s32.totalorder %s70, %s71
      %p85 = scmp.eq.s32.totalorder %s19, 1
      %p86 = por %p84, %p85
      %p88 = scmp.ne.s32.totalorder %s71, %s87
      %p89 = scmp.eq.s32.totalorder %s19, 0
      %p90 = por %p88, %p89
      %s92 = sadd.s32 %s91, 1
      %p95 = scmp.eq.s32.totalorder %s13, 1
      %p96 = scmp.ne.s32.totalorder %s91, %s93
      %p97 = scmp.eq.s32.totalorder %s13, 0
      %p98 = por %p96, %p97
      %p99 = scmp.ne.s32.totalorder %s91, %s93
      %p100 = scmp.eq.s32.totalorder %s18, 1
      %p101 = por %p99, %p100
      %p102 = scmp.ne.s32.totalorder %s93, %s94
      %p103 = scmp.eq.s32.totalorder %s18, 0
      %p104 = por %p102, %p103
      %p105 = scmp.ne.s32.totalorder %s93, %s94
      %p106 = scmp.eq.s32.totalorder %s19, 1
      %p107 = por %p105, %p106
      %p109 = scmp.ne.s32.totalorder %s94, %s108
      %p110 = scmp.eq.s32.totalorder %s19, 0
      %p111 = por %p109, %p110
      %s113 = sadd.s32 %s112, 1
      %p116 = scmp.eq.s32.totalorder %s13, 1
      %p117 = scmp.ne.s32.totalorder %s112, %s114
      %p118 = scmp.eq.s32.totalorder %s13, 0
      %p119 = por %p117, %p118
      %p120 = scmp.ne.s32.totalorder %s112, %s114
      %p121 = scmp.eq.s32.totalorder %s18, 1
      %p122 = por %p120, %p121
      %p123 = scmp.ne.s32.totalorder %s114, %s115
      %p124 = scmp.eq.s32.totalorder %s18, 0
      %p125 = por %p123, %p124
      %p126 = scmp.ne.s32.totalorder %s114, %s115
      %p127 = scmp.eq.s32.totalorder %s19, 1
      %p128 = por %p126, %p127
      %p130 = scmp.ne.s32.totalorder %s115, %s129
      %p131 = scmp.eq.s32.totalorder %s19, 0
      %p132 = por %p130, %p131
      %s134 = sadd.s32 %s133, 1
      %p137 = scmp.eq.s32.totalorder %s13, 1
      %p138 = scmp.ne.s32.totalorder %s133, %s135
      %p139 = scmp.eq.s32.totalorder %s13, 0
      %p140 = por %p138, %p139
      %p141 = scmp.ne.s32.totalorder %s133, %s135
      %p142 = scmp.eq.s32.totalorder %s18, 1
      %p143 = por %p141, %p142
      %p144 = scmp.ne.s32.totalorder %s135, %s136
      %p145 = scmp.eq.s32.totalorder %s18, 0
      %p146 = por %p144, %p145
      %p147 = scmp.ne.s32.totalorder %s135, %s136
      %p148 = scmp.eq.s32.totalorder %s19, 1
      %p149 = por %p147, %p148
      %p151 = scmp.ne.s32.totalorder %s136, %s150
      %p152 = scmp.eq.s32.totalorder %s19, 0
      %p153 = por %p151, %p152
      %s155 = sadd.s32 %s154, 1
      %p158 = scmp.eq.s32.totalorder %s13, 1
      %p159 = scmp.ne.s32.totalorder %s154, %s156
      %p160 = scmp.eq.s32.totalorder %s13, 0
      %p161 = por %p159, %p160
      %p162 = scmp.ne.s32.totalorder %s154, %s156
      %p163 = scmp.eq.s32.totalorder %s18, 1
      %p164 = por %p162, %p163
      %p165 = scmp.ne.s32.totalorder %s156, %s157
      %p166 = scmp.eq.s32.totalorder %s18, 0
      %p167 = por %p165, %p166
      %p168 = scmp.ne.s32.totalorder %s156, %s157
      %p169 = scmp.eq.s32.totalorder %s19, 1
      %p170 = por %p168, %p169
      %p172 = scmp.ne.s32.totalorder %s157, %s171
      %p173 = scmp.eq.s32.totalorder %s19, 0
      %p174 = por %p172, %p173
      %s175 = ssub.s32 %s21, %s28
      %s176 = ssub.s32 %s20, %s32
      %s177 = sor.u32 %s175, %s176
      %p178 = scmp.eq.s32.totalorder %s177, 0
      %s180 = sadd.s32 %s179, 1
      %s181 = scalar_select %p178, %s179, %s180
      %p184 = pneg %p178
      %p185 = scmp.eq.s32.totalorder %s13, 1
      %p186 = por %p184, %p185
      %p187 = scmp.ne.s32.totalorder %s179, %s182
      %p188 = scmp.eq.s32.totalorder %s13, 0
      %p189 = por %p187, %p188
      %p190 = scmp.ne.s32.totalorder %s179, %s182
      %p191 = scmp.eq.s32.totalorder %s18, 1
      %p192 = por %p190, %p191
      %p193 = scmp.ne.s32.totalorder %s182, %s183
      %p194 = scmp.eq.s32.totalorder %s18, 0
      %p195 = por %p193, %p194
      %p196 = scmp.ne.s32.totalorder %s182, %s183
      %p197 = scmp.eq.s32.totalorder %s19, 1
      %p198 = por %p196, %p197
      %p200 = scmp.ne.s32.totalorder %s183, %s199
      %p201 = scmp.eq.s32.totalorder %s19, 0
      %p202 = por %p200, %p201
      %s203 = ssub.s32 %s21, %s28
      %s204 = ssub.s32 %s20, %s32
      %s205 = sor.u32 %s203, %s204
      %p206 = scmp.eq.s32.totalorder %s205, 0
      %s208 = sadd.s32 %s207, 1
      %s209 = scalar_select %p206, %s207, %s208
      %p212 = pneg %p206
      %p213 = scmp.eq.s32.totalorder %s13, 1
      %p214 = por %p212, %p213
      %p215 = scmp.ne.s32.totalorder %s207, %s210
      %p216 = scmp.eq.s32.totalorder %s13, 0
      %p217 = por %p215, %p216
      %p218 = scmp.ne.s32.totalorder %s207, %s210
      %p219 = scmp.eq.s32.totalorder %s18, 1
      %p220 = por %p218, %p219
      %p221 = scmp.ne.s32.totalorder %s210, %s211
      %p222 = scmp.eq.s32.totalorder %s18, 0
      %p223 = por %p221, %p222
      %p224 = scmp.ne.s32.totalorder %s210, %s211
      %p225 = scmp.eq.s32.totalorder %s19, 1
      %p226 = por %p224, %p225
      %p228 = scmp.ne.s32.totalorder %s211, %s227
      %p229 = scmp.eq.s32.totalorder %s19, 0
      %p230 = por %p228, %p229
      %p231 = scmp.le.s32.totalorder 1, %s13
      %p232 = scmp.lt.s32.totalorder %s13, 3
      %p233 = pnand %p231, %p232
      %p234 = pneg %p233
      // Predicated region
      $region9: #{multi_scale_fpn_forward.3} parent=5 // pred_check
        _
      $region10: #{multi_scale_fpn_forward.3} parent=5 // pred_check_branch
        %236 = sbr.rel (%p233) target = $region12
      $region11: #{multi_scale_fpn_forward.3} parent=5 // pred_region
        %s237 = ssub.s32 %s13, 1
        // Predicated region
        $region13: #{multi_scale_fpn_forward.3} parent=11 // pred_check
          %p238 = pneg %p104
        $region14: #{multi_scale_fpn_forward.3} parent=11 // pred_check_branch
          %240 = sbr.rel (%p238) target = $region16
        $region15: #{multi_scale_fpn_forward.3} parent=11 // pred_region
          _
        $region16: #{multi_scale_fpn_forward.3} parent=11 // pred_fallthru
          _
        // Predicated region
        $region17: #{multi_scale_fpn_forward.3} parent=11 // pred_check
          %p241 = pneg %p125
        $region18: #{multi_scale_fpn_forward.3} parent=11 // pred_check_branch
          %243 = sbr.rel (%p241) target = $region20
        $region19: #{multi_scale_fpn_forward.3} parent=11 // pred_region
          _
        $region20: #{multi_scale_fpn_forward.3} parent=11 // pred_fallthru
          _
        // Predicated region
        $region21: #{multi_scale_fpn_forward.3} parent=11 // pred_check
          %p244 = pneg %p146
        $region22: #{multi_scale_fpn_forward.3} parent=11 // pred_check_branch
          %246 = sbr.rel (%p244) target = $region24
        $region23: #{multi_scale_fpn_forward.3} parent=11 // pred_region
          _
        $region24: #{multi_scale_fpn_forward.3} parent=11 // pred_fallthru
          _
        // Predicated region
        $region25: #{multi_scale_fpn_forward.3} parent=11 // pred_check
          %p247 = pneg %p167
        $region26: #{multi_scale_fpn_forward.3} parent=11 // pred_check_branch
          %249 = sbr.rel (%p247) target = $region28
        $region27: #{multi_scale_fpn_forward.3} parent=11 // pred_region
          _
        $region28: #{multi_scale_fpn_forward.3} parent=11 // pred_fallthru
          _
      $region12: #{multi_scale_fpn_forward.3} parent=5 // pred_fallthru
        _
      %p250 = scmp.lt.s32.totalorder %s13, 2
      // Predicated region
      $region29: #{multi_scale_fpn_forward.3} parent=5 // pred_check
        %p251 = pneg %p250
      $region30: #{multi_scale_fpn_forward.3} parent=5 // pred_check_branch
        %253 = sbr.rel (%p251) target = $region32
      $region31: #{multi_scale_fpn_forward.3} parent=5 // pred_region
        // Predicated region
        $region33: #{multi_scale_fpn_forward.3} parent=31 // pred_check
          %p254 = pneg %p47
        $region34: #{multi_scale_fpn_forward.3} parent=31 // pred_check_branch
          %256 = sbr.rel (%p254) target = $region36
        $region35: #{multi_scale_fpn_forward.3} parent=31 // pred_region
          %s257 = sand.u32 %s37, 1
          %s258 = sand.u32 %s37, 1
          %s259 = smul.addr %s258, 8
          %s260 = scalar_lea.vmem [#allocation2], %s259
          %s261 = smul.addr %s21, 4
          %s262 = sadd.s32 %s20, %s261
          %s263 = smul.addr %s262, 4
          %s264 = scalar_lea.vmem %s0, %s263
          // Predicated region
          $region37: #{multi_scale_fpn_forward.3} parent=35 // pred_check
            _
          $region38: #{multi_scale_fpn_forward.3} parent=35 // pred_check_branch
            %266 = sbr.rel (0) target = $region40
          $region39: #{multi_scale_fpn_forward.3} parent=35 // pred_region
            // Predicated region
            $region41: #{multi_scale_fpn_forward.3} parent=39 // pred_check
              _
            $region42: #{multi_scale_fpn_forward.3} parent=39 // pred_check_branch
              %268 = sbr.rel target = $region44
            $region43: #{multi_scale_fpn_forward.3} parent=39 // pred_region
              // Predicated region
              $region56: #{multi_scale_fpn_forward.3} parent=43 // pred_check
                _
              $region57: #{multi_scale_fpn_forward.3} parent=43 // pred_check_branch
                %285 = sbr.rel (0) target = $region59
              $region58: #{multi_scale_fpn_forward.3} parent=43 // pred_region
                loop: start=0, step=1, limit=1
                $region60: #{multi_scale_fpn_forward.3} parent=58 // loop_pre_header
                  _
                $region61: #{multi_scale_fpn_forward.3} parent=58 // loop_header
                  %s287 = sphi 0, %s291
                  %p288 = scmp.ge.s32.totalorder %s287, 1
                  %s292 = sphi %s264, %s264
                  %s293 = sphi %s260, %s260
                $region62: #{multi_scale_fpn_forward.3} parent=58 // loop_header_branch
                  %290 = sbr.rel (%p288) target = $region66
                $region63: #{multi_scale_fpn_forward.3} parent=58 // loop_body
                  _
                $region64: #{multi_scale_fpn_forward.3} parent=58 // loop_footer
                  %s291 = sadd.s32 1, %s287
                $region65: #{multi_scale_fpn_forward.3} parent=58 // loop_footer_branch
                  %286 = sbr.rel target = $region61
                $region66: #{multi_scale_fpn_forward.3} parent=58 // loop_exit
                  _
                loop: start=0, step=1, limit=1
                $region67: #{multi_scale_fpn_forward.3} parent=58 // loop_pre_header
                  _
                $region68: #{multi_scale_fpn_forward.3} parent=58 // loop_header
                  %s296 = sphi 0, %s300
                  %p297 = scmp.ge.s32.totalorder %s296, 1
                  %s301 = sphi %s264, %s264
                  %s302 = sphi %s260, %s260
                $region69: #{multi_scale_fpn_forward.3} parent=58 // loop_header_branch
                  %299 = sbr.rel (%p297) target = $region73
                $region70: #{multi_scale_fpn_forward.3} parent=58 // loop_body
                  %v303 = vld [vmem:[%s301] sm:$0xf]
                  %304 = vst [vmem:[%s302] sm:$0xf] %v303
                  %v305 = vld [vmem:[%s301 + $0x8] sm:$0xf]
                  %306 = vst [vmem:[%s302 + $0x4] sm:$0xf] %v305
                $region71: #{multi_scale_fpn_forward.3} parent=58 // loop_footer
                  %s300 = sadd.s32 1, %s296
                $region72: #{multi_scale_fpn_forward.3} parent=58 // loop_footer_branch
                  %295 = sbr.rel target = $region68
                $region73: #{multi_scale_fpn_forward.3} parent=58 // loop_exit
                  _
              $region59: #{multi_scale_fpn_forward.3} parent=43 // pred_fallthru
                _
            $region44: #{multi_scale_fpn_forward.3} parent=39 // pred_fallthru
              _
            // Predicated region
            $region45: #{multi_scale_fpn_forward.3} parent=39 // pred_check
              _
            $region46: #{multi_scale_fpn_forward.3} parent=39 // pred_check_branch
              %270 = sbr.rel (0) target = $region48
            $region47: #{multi_scale_fpn_forward.3} parent=39 // pred_region
              loop: start=0, step=1, limit=1
              $region49: #{multi_scale_fpn_forward.3} parent=47 // loop_pre_header
                _
              $region50: #{multi_scale_fpn_forward.3} parent=47 // loop_header
                %s273 = sphi 0, %s277
                %p274 = scmp.ge.s32.totalorder %s273, 1
                %s278 = sphi %s264, %s264
                %s279 = sphi %s260, %s260
              $region51: #{multi_scale_fpn_forward.3} parent=47 // loop_header_branch
                %276 = sbr.rel (%p274) target = $region55
              $region52: #{multi_scale_fpn_forward.3} parent=47 // loop_body
                %v280 = vld [vmem:[%s278] sm:$0xf]
                %281 = vst [vmem:[%s279] sm:$0xf] %v280
                %v282 = vld [vmem:[%s278 + $0x8] sm:$0xf]
                %283 = vst [vmem:[%s279 + $0x4] sm:$0xf] %v282
              $region53: #{multi_scale_fpn_forward.3} parent=47 // loop_footer
                %s277 = sadd.s32 1, %s273
              $region54: #{multi_scale_fpn_forward.3} parent=47 // loop_footer_branch
                %272 = sbr.rel target = $region50
              $region55: #{multi_scale_fpn_forward.3} parent=47 // loop_exit
                _
            $region48: #{multi_scale_fpn_forward.3} parent=39 // pred_fallthru
              _
          $region40: #{multi_scale_fpn_forward.3} parent=35 // pred_fallthru
            _
          %307 = vnop
        $region36: #{multi_scale_fpn_forward.3} parent=31 // pred_fallthru
          _
        // Predicated region
        $region74: #{multi_scale_fpn_forward.3} parent=31 // pred_check
          %p308 = pneg %p77
        $region75: #{multi_scale_fpn_forward.3} parent=31 // pred_check_branch
          %310 = sbr.rel (%p308) target = $region77
        $region76: #{multi_scale_fpn_forward.3} parent=31 // pred_region
          %s311 = sand.u32 %s67, 1
          %s312 = sand.u32 %s67, 1
          %s313 = smul.addr %s312, 8
          %s314 = scalar_lea.vmem [#allocation3], %s313
          %s315 = sadd.s32 %s20, 1
          %s316 = smul.addr %s21, 4
          %s317 = sadd.s32 %s315, %s316
          %s318 = smul.addr %s317, 4
          %s319 = scalar_lea.vmem %s1, %s318
          // Predicated region
          $region78: #{multi_scale_fpn_forward.3} parent=76 // pred_check
            _
          $region79: #{multi_scale_fpn_forward.3} parent=76 // pred_check_branch
            %321 = sbr.rel (0) target = $region81
          $region80: #{multi_scale_fpn_forward.3} parent=76 // pred_region
            // Predicated region
            $region82: #{multi_scale_fpn_forward.3} parent=80 // pred_check
              _
            $region83: #{multi_scale_fpn_forward.3} parent=80 // pred_check_branch
              %323 = sbr.rel target = $region85
            $region84: #{multi_scale_fpn_forward.3} parent=80 // pred_region
              // Predicated region
              $region97: #{multi_scale_fpn_forward.3} parent=84 // pred_check
                _
              $region98: #{multi_scale_fpn_forward.3} parent=84 // pred_check_branch
                %340 = sbr.rel (0) target = $region100
              $region99: #{multi_scale_fpn_forward.3} parent=84 // pred_region
                loop: start=0, step=1, limit=1
                $region101: #{multi_scale_fpn_forward.3} parent=99 // loop_pre_header
                  _
                $region102: #{multi_scale_fpn_forward.3} parent=99 // loop_header
                  %s342 = sphi 0, %s346
                  %p343 = scmp.ge.s32.totalorder %s342, 1
                  %s347 = sphi %s319, %s319
                  %s348 = sphi %s314, %s314
                $region103: #{multi_scale_fpn_forward.3} parent=99 // loop_header_branch
                  %345 = sbr.rel (%p343) target = $region107
                $region104: #{multi_scale_fpn_forward.3} parent=99 // loop_body
                  _
                $region105: #{multi_scale_fpn_forward.3} parent=99 // loop_footer
                  %s346 = sadd.s32 1, %s342
                $region106: #{multi_scale_fpn_forward.3} parent=99 // loop_footer_branch
                  %341 = sbr.rel target = $region102
                $region107: #{multi_scale_fpn_forward.3} parent=99 // loop_exit
                  _
                loop: start=0, step=1, limit=1
                $region108: #{multi_scale_fpn_forward.3} parent=99 // loop_pre_header
                  _
                $region109: #{multi_scale_fpn_forward.3} parent=99 // loop_header
                  %s351 = sphi 0, %s355
                  %p352 = scmp.ge.s32.totalorder %s351, 1
                  %s356 = sphi %s319, %s319
                  %s357 = sphi %s314, %s314
                $region110: #{multi_scale_fpn_forward.3} parent=99 // loop_header_branch
                  %354 = sbr.rel (%p352) target = $region114
                $region111: #{multi_scale_fpn_forward.3} parent=99 // loop_body
                  %v358 = vld [vmem:[%s356] sm:$0xf]
                  %359 = vst [vmem:[%s357] sm:$0xf] %v358
                  %v360 = vld [vmem:[%s356 + $0x8] sm:$0xf]
                  %361 = vst [vmem:[%s357 + $0x4] sm:$0xf] %v360
                $region112: #{multi_scale_fpn_forward.3} parent=99 // loop_footer
                  %s355 = sadd.s32 1, %s351
                $region113: #{multi_scale_fpn_forward.3} parent=99 // loop_footer_branch
                  %350 = sbr.rel target = $region109
                $region114: #{multi_scale_fpn_forward.3} parent=99 // loop_exit
                  _
              $region100: #{multi_scale_fpn_forward.3} parent=84 // pred_fallthru
                _
            $region85: #{multi_scale_fpn_forward.3} parent=80 // pred_fallthru
              _
            // Predicated region
            $region86: #{multi_scale_fpn_forward.3} parent=80 // pred_check
              _
            $region87: #{multi_scale_fpn_forward.3} parent=80 // pred_check_branch
              %325 = sbr.rel (0) target = $region89
            $region88: #{multi_scale_fpn_forward.3} parent=80 // pred_region
              loop: start=0, step=1, limit=1
              $region90: #{multi_scale_fpn_forward.3} parent=88 // loop_pre_header
                _
              $region91: #{multi_scale_fpn_forward.3} parent=88 // loop_header
                %s328 = sphi 0, %s332
                %p329 = scmp.ge.s32.totalorder %s328, 1
                %s333 = sphi %s319, %s319
                %s334 = sphi %s314, %s314
              $region92: #{multi_scale_fpn_forward.3} parent=88 // loop_header_branch
                %331 = sbr.rel (%p329) target = $region96
              $region93: #{multi_scale_fpn_forward.3} parent=88 // loop_body
                %v335 = vld [vmem:[%s333] sm:$0xf]
                %336 = vst [vmem:[%s334] sm:$0xf] %v335
                %v337 = vld [vmem:[%s333 + $0x8] sm:$0xf]
                %338 = vst [vmem:[%s334 + $0x4] sm:$0xf] %v337
              $region94: #{multi_scale_fpn_forward.3} parent=88 // loop_footer
                %s332 = sadd.s32 1, %s328
              $region95: #{multi_scale_fpn_forward.3} parent=88 // loop_footer_branch
                %327 = sbr.rel target = $region91
              $region96: #{multi_scale_fpn_forward.3} parent=88 // loop_exit
                _
            $region89: #{multi_scale_fpn_forward.3} parent=80 // pred_fallthru
              _
          $region81: #{multi_scale_fpn_forward.3} parent=76 // pred_fallthru
            _
          %362 = vnop
        $region77: #{multi_scale_fpn_forward.3} parent=31 // pred_fallthru
          _
        // Predicated region
        $region115: #{multi_scale_fpn_forward.3} parent=31 // pred_check
          %p363 = pneg %p189
        $region116: #{multi_scale_fpn_forward.3} parent=31 // pred_check_branch
          %365 = sbr.rel (%p363) target = $region118
        $region117: #{multi_scale_fpn_forward.3} parent=31 // pred_region
          %p366 = scmp.lt.s32.totalorder %s21, 1
          %s367 = scalar_select %p366, %s21, 1
          %p368 = scmp.lt.s32.totalorder %s20, 0
          %s369 = scalar_select %p368, %s20, 0
          %s370 = sadd.s32 %s369, %s367
          %s371 = scalar_lea.vmem %s6, %s370
        $region118: #{multi_scale_fpn_forward.3} parent=31 // pred_fallthru
          _
      $region32: #{multi_scale_fpn_forward.3} parent=5 // pred_fallthru
        _
      %p372 = scmp.le.s32.totalorder 1, %s13
      %p373 = scmp.lt.s32.totalorder %s13, 3
      %p374 = pnand %p372, %p373
      %p375 = pneg %p374
      // Predicated region
      $region119: #{multi_scale_fpn_forward.3} parent=5 // pred_check
        _
      $region120: #{multi_scale_fpn_forward.3} parent=5 // pred_check_branch
        %377 = sbr.rel (%p374) target = $region122
      $region121: #{multi_scale_fpn_forward.3} parent=5 // pred_region
        %s378 = ssub.s32 %s13, 1
        %s379 = sand.u32 %s40, 1
        %s380 = sand.u32 %s40, 1
        %s381 = smul.addr %s380, 8
        %s382 = scalar_lea.vmem [#allocation2], %s381
        // Predicated region
        $region123: #{multi_scale_fpn_forward.3} parent=121 // pred_check
          %p383 = pneg %p53
        $region124: #{multi_scale_fpn_forward.3} parent=121 // pred_check_branch
          %385 = sbr.rel (%p383) target = $region126
        $region125: #{multi_scale_fpn_forward.3} parent=121 // pred_region
          _
        $region126: #{multi_scale_fpn_forward.3} parent=121 // pred_fallthru
          _
        %s386 = sand.u32 %s70, 1
        %s387 = sand.u32 %s70, 1
        %s388 = smul.addr %s387, 8
        %s389 = scalar_lea.vmem [#allocation3], %s388
        // Predicated region
        $region127: #{multi_scale_fpn_forward.3} parent=121 // pred_check
          %p390 = pneg %p83
        $region128: #{multi_scale_fpn_forward.3} parent=121 // pred_check_branch
          %392 = sbr.rel (%p390) target = $region130
        $region129: #{multi_scale_fpn_forward.3} parent=121 // pred_region
          _
        $region130: #{multi_scale_fpn_forward.3} parent=121 // pred_fallthru
          _
        %s393 = sand.u32 %s40, 1
        %s394 = sand.u32 %s40, 1
        %s395 = smul.addr %s394, 8
        %s396 = scalar_lea.vmem [#allocation2], %s395
        %p397 = pneg %p53
        %p398 = pneg %p50
        %s399 = sand.u32 %s70, 1
        %s400 = sand.u32 %s70, 1
        %s401 = smul.addr %s400, 8
        %s402 = scalar_lea.vmem [#allocation3], %s401
        %p403 = pneg %p83
        %p404 = pneg %p80
        %p405 = pneg %p104
        %p406 = pneg %p101
        %p407 = pneg %p125
        %p408 = pneg %p122
        %p409 = pneg %p146
        %p410 = pneg %p143
        %p411 = pneg %p167
        %p412 = pneg %p164
        %p413 = scmp.lt.s32.totalorder %s23, 1
        %s414 = scalar_select %p413, %s23, 1
        %p415 = scmp.lt.s32.totalorder %s22, 0
        %s416 = scalar_select %p415, %s22, 0
        %s417 = sadd.s32 %s416, %s414
        %s418 = scalar_lea.vmem %s6, %s417
        %p419 = pneg %p195
        %p420 = pneg %p192
        %p421 = pneg %p223
        %p422 = pneg %p220
        %p423 = scmp.lt.s32.totalorder %s23, 1
        %s424 = scalar_select %p423, %s23, 1
        %p425 = scmp.lt.s32.totalorder %s22, 0
        %s426 = scalar_select %p425, %s22, 0
        %s427 = smul.addr %s424, 4
        %s428 = sadd.s32 %s426, %s427
        %s429 = smul.addr %s428, 8
        %s430 = scalar_lea.vmem %s7, %s429
        %s431 = sadd.s32 %s22, 1
        %p432 = scmp.lt.s32.totalorder %s23, 1
        %s433 = scalar_select %p432, %s23, 1
        %p434 = scmp.lt.s32.totalorder %s22, 0
        %s435 = scalar_select %p434, %s22, 0
        %s436 = sadd.s32 %s435, %s433
        %s437 = scalar_lea.vmem %s6, %s436
        %p438 = scmp.lt.s32.totalorder %s23, 1
        %s439 = scalar_select %p438, %s23, 1
        %p440 = scmp.lt.s32.totalorder %s22, 0
        %s441 = scalar_select %p440, %s22, 0
        %s442 = smul.addr %s439, 4
        %s443 = sadd.s32 %s441, %s442
        %s444 = smul.addr %s443, 8
        %s445 = scalar_lea.vmem %s7, %s444
        %v447 = vld [vmem:[%s382] sm:$0xf]
        %v448 = vld [vmem:[%s382 + $0x4] sm:$0xf]
        %v449 = vld [vmem:[%s389] sm:$0xf]
        %v450 = vld [vmem:[%s389 + $0x4] sm:$0xf]
        %v453 = vunpack.c.l.b16 %v447
        %v454 = vunpack.c.l.b16 %v448
        %v455 = vpack.c.b16 %v454, %v453
        %v459 = vunpack.c.l.b16 %v449
        %v460 = vunpack.c.l.b16 %v450
        %v461 = vpack.c.b16 %v460, %v459
        %v462 = vld [vmem:[%s2] sm:$0xf]
        %v463 = vld [vmem:[%s2 + $0x4] sm:$0xf]
        %v464 = vld [vmem:[%s2 + $0x8] sm:$0xf]
        %v465 = vld [vmem:[%s2 + $0xc] sm:$0xf]
        %s466 = scalar_lea.vmem %s2, 16
        %v467 = vld [vmem:[%s466] sm:$0xf]
        %v468 = vld [vmem:[%s466 + $0x4] sm:$0xf]
        %v469 = vld [vmem:[%s466 + $0x8] sm:$0xf]
        %v470 = vld [vmem:[%s466 + $0xc] sm:$0xf]
        %v475 = vunpack.c.l.b16 %v467
        %v476 = vunpack.c.l.b16 %v468
        %v477 = vunpack.c.l.b16 %v469
        %v478 = vunpack.c.l.b16 %v470
        %v479 = vpack.c.b16 %v476, %v475
        %v480 = vpack.c.b16 %v478, %v477
        %481 = vrot.lane.b32.xlu0 %v455, 127
        %v482 = vpop.permute.xlu0 %481
        %483 = vrot.lane.b32.xlu0 %v461, 127
        %v484 = vpop.permute.xlu0 %483
        %vm485 = vcmask 1039360
        %v486 = vsel %vm485, %v482, %v484
        %vm488 = vcmask 130048
        %v490 = vsel %vm488, %v479, 0
        %v493 = vsel %vm488, %v480, 0
        %495 = vmatprep.subr.bf16.mxu0 0
        %496 = vmatpush1.bf16.msra.mxu0 %v486
        %497 = vmatprep.subr.bf16.mxu0 0
        %498 = vmatpush1.bf16.msra.mxu0 0
        %499 = vmatprep.subr.bf16.mxu0 0
        %500 = vmatpush1.bf16.msra.mxu0 0
        %501 = vmatprep.subr.bf16.mxu0 0
        %502 = vmatpush1.bf16.msra.mxu0 0
        %503 = vmatprep.subr.bf16.mxu0 0
        %504 = vmatpush1.bf16.msra.mxu0 0
        %505 = vmatprep.subr.bf16.mxu0 0
        %506 = vmatpush1.bf16.msra.mxu0 0
        %507 = vmatprep.subr.bf16.mxu0 0
        %508 = vmatpush1.bf16.msra.mxu0 0
        %509 = vmatprep.subr.bf16.mxu0 0
        %510 = vmatpush1.bf16.msra.mxu0 0
        %511 = vmatprep.subr.bf16.mxu0 0
        %512 = vmatpush1.bf16.msra.mxu0 0
        %513 = vmatprep.subr.bf16.mxu0 0
        %514 = vmatpush1.bf16.msra.mxu0 0
        %515 = vmatprep.subr.bf16.mxu0 0
        %516 = vmatpush1.bf16.msra.mxu0 0
        %517 = vmatprep.subr.bf16.mxu0 0
        %518 = vmatpush1.bf16.msra.mxu0 0
        %519 = vmatprep.subr.bf16.mxu0 0
        %520 = vmatpush1.bf16.msra.mxu0 0
        %521 = vmatprep.subr.bf16.mxu0 0
        %522 = vmatpush1.bf16.msra.mxu0 0
        %523 = vmatprep.subr.bf16.mxu0 0
        %524 = vmatpush1.bf16.msra.mxu0 0
        %525 = vmatprep.subr.bf16.mxu0 0
        %526 = vmatpush1.bf16.msra.mxu0 0
        %527 = vmatprep.mubr.bf16.mxu0 0
        %528 = vmatmul.mubr.bf16.gmra.mrb[0].mxu0 %v490
        %v529 = vpop.f32.mrb[0].mxu0
        %v530 = vadd.f32 0.0, %v529
        %v531 = vpop.f32.mrb[0].mxu0
        %v532 = vpop.f32.mrb[0].mxu0
        %v533 = vadd.f32 0.0, %v532
        %v534 = vpop.f32.mrb[0].mxu0
        %535 = vmatprep.mubr.bf16.mxu0 0
        %536 = vmatmul.mubr.bf16.gmra.mrb[0].mxu0 %v493
        %v537 = vpop.f32.mrb[0].mxu0
        %v538 = vadd.f32 0.0, %v537
        %v539 = vpop.f32.mrb[0].mxu0
        %v540 = vpop.f32.mrb[0].mxu0
        %v541 = vadd.f32 0.0, %v540
        %v542 = vpop.f32.mrb[0].mxu0
        %543 = vdwg.mxu0
        %v548 = vunpack.c.l.b16 %v462
        %v549 = vunpack.c.l.b16 %v463
        %v550 = vunpack.c.l.b16 %v464
        %v551 = vunpack.c.l.b16 %v465
        %v552 = vpack.c.b16 %v549, %v548
        %v553 = vpack.c.b16 %v551, %v550
        %v555 = vsel %vm488, %v552, 0
        %v558 = vsel %vm488, %v553, 0
        %560 = vmatprep.subr.bf16.mxu0 0
        %561 = vmatpush1.bf16.msra.mxu0 %v455
        %562 = vmatprep.subr.bf16.mxu0 0
        %563 = vmatpush1.bf16.msra.mxu0 0
        %564 = vmatprep.subr.bf16.mxu0 0
        %565 = vmatpush1.bf16.msra.mxu0 0
        %566 = vmatprep.subr.bf16.mxu0 0
        %567 = vmatpush1.bf16.msra.mxu0 0
        %568 = vmatprep.subr.bf16.mxu0 0
        %569 = vmatpush1.bf16.msra.mxu0 0
        %570 = vmatprep.subr.bf16.mxu0 0
        %571 = vmatpush1.bf16.msra.mxu0 0
        %572 = vmatprep.subr.bf16.mxu0 0
        %573 = vmatpush1.bf16.msra.mxu0 0
        %574 = vmatprep.subr.bf16.mxu0 0
        %575 = vmatpush1.bf16.msra.mxu0 0
        %576 = vmatprep.subr.bf16.mxu0 0
        %577 = vmatpush1.bf16.msra.mxu0 0
        %578 = vmatprep.subr.bf16.mxu0 0
        %579 = vmatpush1.bf16.msra.mxu0 0
        %580 = vmatprep.subr.bf16.mxu0 0
        %581 = vmatpush1.bf16.msra.mxu0 0
        %582 = vmatprep.subr.bf16.mxu0 0
        %583 = vmatpush1.bf16.msra.mxu0 0
        %584 = vmatprep.subr.bf16.mxu0 0
        %585 = vmatpush1.bf16.msra.mxu0 0
        %586 = vmatprep.subr.bf16.mxu0 0
        %587 = vmatpush1.bf16.msra.mxu0 0
        %588 = vmatprep.subr.bf16.mxu0 0
        %589 = vmatpush1.bf16.msra.mxu0 0
        %590 = vmatprep.subr.bf16.mxu0 0
        %591 = vmatpush1.bf16.msra.mxu0 0
        %592 = vmatprep.mubr.bf16.mxu0 0
        %593 = vmatmul.mubr.bf16.gmra.mrb[0].mxu0 %v555
        %v594 = vpop.f32.mrb[0].mxu0
        %v595 = vadd.f32 %v530, %v594
        %v596 = vpop.f32.mrb[0].mxu0
        %v597 = vpop.f32.mrb[0].mxu0
        %v598 = vadd.f32 %v533, %v597
        %v599 = vpop.f32.mrb[0].mxu0
        %600 = vmatprep.mubr.bf16.mxu0 0
        %601 = vmatmul.mubr.bf16.gmra.mrb[0].mxu0 %v558
        %v602 = vpop.f32.mrb[0].mxu0
        %v603 = vadd.f32 %v538, %v602
        %v604 = vpop.f32.mrb[0].mxu0
        %v605 = vpop.f32.mrb[0].mxu0
        %v606 = vadd.f32 %v541, %v605
        %v607 = vpop.f32.mrb[0].mxu0
        %608 = vdwg.mxu0
        %s609 = scalar_lea.vmem %s2, 32
        %v610 = vld [vmem:[%s609] sm:$0xf]
        %v611 = vld [vmem:[%s609 + $0x4] sm:$0xf]
        %v612 = vld [vmem:[%s609 + $0x8] sm:$0xf]
        %v613 = vld [vmem:[%s609 + $0xc] sm:$0xf]
        %v618 = vunpack.c.l.b16 %v610
        %v619 = vunpack.c.l.b16 %v611
        %v620 = vunpack.c.l.b16 %v612
        %v621 = vunpack.c.l.b16 %v613
        %v622 = vpack.c.b16 %v619, %v618
        %v623 = vpack.c.b16 %v621, %v620
        %624 = vrot.lane.b32.xlu0 %v455, 126
        %v625 = vpop.permute.xlu0 %624
        %626 = vrot.lane.b32.xlu0 %v461, 126
        %v627 = vpop.permute.xlu0 %626
        %vm628 = vcmask 1031168
        %v629 = vsel %vm628, %v625, %v627
        %v632 = vsel %vm488, %v622, 0
        %v635 = vsel %vm488, %v623, 0
        %637 = vmatprep.subr.bf16.mxu0 0
        %638 = vmatpush1.bf16.msra.mxu0 %v629
        %639 = vmatprep.subr.bf16.mxu0 0
        %640 = vmatpush1.bf16.msra.mxu0 0
        %641 = vmatprep.subr.bf16.mxu0 0
        %642 = vmatpush1.bf16.msra.mxu0 0
        %643 = vmatprep.subr.bf16.mxu0 0
        %644 = vmatpush1.bf16.msra.mxu0 0
        %645 = vmatprep.subr.bf16.mxu0 0
        %646 = vmatpush1.bf16.msra.mxu0 0
        %647 = vmatprep.subr.bf16.mxu0 0
        %648 = vmatpush1.bf16.msra.mxu0 0
        %649 = vmatprep.subr.bf16.mxu0 0
        %650 = vmatpush1.bf16.msra.mxu0 0
        %651 = vmatprep.subr.bf16.mxu0 0
        %652 = vmatpush1.bf16.msra.mxu0 0
        %653 = vmatprep.subr.bf16.mxu0 0
        %654 = vmatpush1.bf16.msra.mxu0 0
        %655 = vmatprep.subr.bf16.mxu0 0
        %656 = vmatpush1.bf16.msra.mxu0 0
        %657 = vmatprep.subr.bf16.mxu0 0
        %658 = vmatpush1.bf16.msra.mxu0 0
        %659 = vmatprep.subr.bf16.mxu0 0
        %660 = vmatpush1.bf16.msra.mxu0 0
        %661 = vmatprep.subr.bf16.mxu0 0
        %662 = vmatpush1.bf16.msra.mxu0 0
        %663 = vmatprep.subr.bf16.mxu0 0
        %664 = vmatpush1.bf16.msra.mxu0 0
        %665 = vmatprep.subr.bf16.mxu0 0
        %666 = vmatpush1.bf16.msra.mxu0 0
        %667 = vmatprep.subr.bf16.mxu0 0
        %668 = vmatpush1.bf16.msra.mxu0 0
        %669 = vmatprep.mubr.bf16.mxu0 0
        %670 = vmatmul.mubr.bf16.gmra.mrb[0].mxu0 %v632
        %v671 = vpop.f32.mrb[0].mxu0
        %v672 = vadd.f32 0.0, %v671
        %v673 = vpop.f32.mrb[0].mxu0
        %v674 = vpop.f32.mrb[0].mxu0
        %v675 = vadd.f32 0.0, %v674
        %v676 = vpop.f32.mrb[0].mxu0
        %677 = vmatprep.mubr.bf16.mxu0 0
        %678 = vmatmul.mubr.bf16.gmra.mrb[0].mxu0 %v635
        %v679 = vpop.f32.mrb[0].mxu0
        %v680 = vadd.f32 0.0, %v679
        %v681 = vpop.f32.mrb[0].mxu0
        %v682 = vpop.f32.mrb[0].mxu0
        %v683 = vadd.f32 0.0, %v682
        %v684 = vpop.f32.mrb[0].mxu0
        %685 = vdwg.mxu0
        %v686 = vadd.f32 %v595, %v672
        %v687 = vadd.f32 %v598, %v675
        %v688 = vadd.f32 %v603, %v680
        %v689 = vadd.f32 %v606, %v683
        %v690 = vld [vmem:[%s3] sm:$0xff]
        %v691 = vld [vmem:[%s3 + $0x8] sm:$0xff]
        %v692 = vld [vmem:[%s3 + $0x10] sm:$0xff]
        %v693 = vld [vmem:[%s3 + $0x18] sm:$0xff]
        %695 = vset.pattern.permute.xlu0 0
        %696 = vperm.xlu0 %695, %v690
        %v697 = vpop.permute.xlu0 %696
        %700 = vset.pattern.permute.xlu0 0
        %701 = vperm.xlu0 %700, %v691
        %v702 = vpop.permute.xlu0 %701
        %705 = vset.pattern.permute.xlu0 0
        %706 = vperm.xlu0 %705, %v692
        %v707 = vpop.permute.xlu0 %706
        %710 = vset.pattern.permute.xlu0 0
        %711 = vperm.xlu0 %710, %v693
        %v712 = vpop.permute.xlu0 %711
        %v714 = vadd.f32 %v686, %v697
        %v715 = vadd.f32 %v687, %v702
        %v716 = vadd.f32 %v688, %v707
        %v717 = vadd.f32 %v689, %v712
        %v718 = vld [vmem:[%s437] sm:$0x1]
        %v720 = vlaneseq
        %v721 = vshrl.u32 %v720, 7
        %v722 = vsub.s32 0, %v721
        %v723 = vrot.slane %v718, %v722
        %v725 = vmul.f32 %v714, %v723
        %v726 = vmul.f32 %v715, %v723
        %v727 = vmul.f32 %v716, %v723
        %v728 = vmul.f32 %v717, %v723
        %v729 = vadd.f32 %v725, %v726
        %v730 = vadd.f32 %v729, %v727
        %v731 = vadd.f32 %v730, %v728
        %v732 = vrot.slane %v731, 4
        %v733 = vadd.f32 %v731, %v732
        %v734 = vrot.slane %v733, 2
        %v735 = vadd.f32 %v733, %v734
        %v736 = vrot.slane %v735, 1
        %v737 = vadd.f32 %v735, %v736
        %v738 = vmul.f32 %v737, 0.03125
        %v739 = vmul.f32 %v725, %v725
        %v740 = vmul.f32 %v726, %v726
        %v741 = vmul.f32 %v727, %v727
        %v742 = vmul.f32 %v728, %v728
        %v743 = vadd.f32 %v739, %v740
        %v744 = vadd.f32 %v743, %v741
        %v745 = vadd.f32 %v744, %v742
        %v746 = vrot.slane %v745, 4
        %v747 = vadd.f32 %v745, %v746
        %v748 = vrot.slane %v747, 2
        %v749 = vadd.f32 %v747, %v748
        %v750 = vrot.slane %v749, 1
        %v751 = vadd.f32 %v749, %v750
        %v752 = vmul.f32 %v751, 0.03125
        %v753 = vmul.f32 %v738, %v738
        %v754 = vsub.f32 %v752, %v753
        %v755 = vadd.f32 %v754, 1e-05
        %v756 = vrsqrt.pop %v755
        %v757 = vsub.f32 %v725, %v738
        %v758 = vsub.f32 %v726, %v738
        %v759 = vsub.f32 %v727, %v738
        %v760 = vsub.f32 %v728, %v738
        %v761 = vld [vmem:[%s4] sm:$0xff]
        %v762 = vld [vmem:[%s4 + $0x8] sm:$0xff]
        %v763 = vld [vmem:[%s4 + $0x10] sm:$0xff]
        %v764 = vld [vmem:[%s4 + $0x18] sm:$0xff]
        %766 = vset.pattern.permute.xlu0 0
        %767 = vperm.xlu0 %766, %v761
        %v768 = vpop.permute.xlu0 %767
        %771 = vset.pattern.permute.xlu0 0
        %772 = vperm.xlu0 %771, %v762
        %v773 = vpop.permute.xlu0 %772
        %776 = vset.pattern.permute.xlu0 0
        %777 = vperm.xlu0 %776, %v763
        %v778 = vpop.permute.xlu0 %777
        %781 = vset.pattern.permute.xlu0 0
        %782 = vperm.xlu0 %781, %v764
        %v783 = vpop.permute.xlu0 %782
        %v785 = vmul.f32 %v756, %v768
        %v786 = vmul.f32 %v756, %v773
        %v787 = vmul.f32 %v756, %v778
        %v788 = vmul.f32 %v756, %v783
        %v789 = vmul.f32 %v757, %v785
        %v790 = vmul.f32 %v758, %v786
        %v791 = vmul.f32 %v759, %v787
        %v792 = vmul.f32 %v760, %v788
        %v793 = vld [vmem:[%s5] sm:$0xff]
        %v794 = vld [vmem:[%s5 + $0x8] sm:$0xff]
        %v795 = vld [vmem:[%s5 + $0x10] sm:$0xff]
        %v796 = vld [vmem:[%s5 + $0x18] sm:$0xff]
        %798 = vset.pattern.permute.xlu0 0
        %799 = vperm.xlu0 %798, %v793
        %v800 = vpop.permute.xlu0 %799
        %803 = vset.pattern.permute.xlu0 0
        %804 = vperm.xlu0 %803, %v794
        %v805 = vpop.permute.xlu0 %804
        %808 = vset.pattern.permute.xlu0 0
        %809 = vperm.xlu0 %808, %v795
        %v810 = vpop.permute.xlu0 %809
        %813 = vset.pattern.permute.xlu0 0
        %814 = vperm.xlu0 %813, %v796
        %v815 = vpop.permute.xlu0 %814
        %v817 = vadd.f32 %v789, %v800
        %v818 = vadd.f32 %v790, %v805
        %v819 = vadd.f32 %v791, %v810
        %v820 = vadd.f32 %v792, %v815
        %821 = vst [vmem:[%s445] sm:$0xff] %v817
        %822 = vst [vmem:[%s445 + $0x8] sm:$0xff] %v818
        %823 = vst [vmem:[%s445 + $0x10] sm:$0xff] %v819
        %824 = vst [vmem:[%s445 + $0x18] sm:$0xff] %v820
        %p825 = scmp.lt.s32.totalorder %s23, 1
        %s826 = scalar_select %p825, %s23, 1
        %p827 = scmp.lt.s32.totalorder %s22, 0
        %s828 = scalar_select %p827, %s22, 0
        %s829 = smul.addr %s826, 4
        %s830 = sadd.s32 %s828, %s829
        %s831 = smul.addr %s830, 8
        %s832 = scalar_lea.vmem %s7, %s831
        // Predicated region
        $region131: #{multi_scale_fpn_forward.3} parent=121 // pred_check
          %p833 = pneg %p220
        $region132: #{multi_scale_fpn_forward.3} parent=121 // pred_check_branch
          %835 = sbr.rel (%p833) target = $region134
        $region133: #{multi_scale_fpn_forward.3} parent=121 // pred_region
          _
        $region134: #{multi_scale_fpn_forward.3} parent=121 // pred_fallthru
          _
      $region122: #{multi_scale_fpn_forward.3} parent=5 // pred_fallthru
        _
      %p836 = scmp.le.s32.totalorder 2, %s13
      // Predicated region
      $region135: #{multi_scale_fpn_forward.3} parent=5 // pred_check
        %p837 = pneg %p836
      $region136: #{multi_scale_fpn_forward.3} parent=5 // pred_check_branch
        %839 = sbr.rel (%p837) target = $region138
      $region137: #{multi_scale_fpn_forward.3} parent=5 // pred_region
        %s840 = ssub.s32 %s13, 2
        // Predicated region
        $region139: #{multi_scale_fpn_forward.3} parent=137 // pred_check
          %p841 = pneg %p226
        $region140: #{multi_scale_fpn_forward.3} parent=137 // pred_check_branch
          %843 = sbr.rel (%p841) target = $region142
        $region141: #{multi_scale_fpn_forward.3} parent=137 // pred_region
          %p844 = scmp.lt.s32.totalorder %s25, 1
          %s845 = scalar_select %p844, %s25, 1
          %p846 = scmp.lt.s32.totalorder %s24, 0
          %s847 = scalar_select %p846, %s24, 0
          %s848 = smul.addr %s845, 4
          %s849 = sadd.s32 %s847, %s848
          %s850 = smul.addr %s849, 8
          %s851 = scalar_lea.vmem %s7, %s850
        $region142: #{multi_scale_fpn_forward.3} parent=137 // pred_fallthru
          _
      $region138: #{multi_scale_fpn_forward.3} parent=5 // pred_fallthru
        _
    $region6: #{multi_scale_fpn_forward.3} parent=1 // loop_footer
      %s17 = sadd.s32 1, %s13
    $region7: #{multi_scale_fpn_forward.3} parent=1 // loop_footer_branch
      %12 = sbr.rel target = $region3
    $region8: #{multi_scale_fpn_forward.3} parent=1 // loop_exit
      _

</llo_original>
